<compile_context>
chip_gen: v7x
topology: tpu7x:2x2x1
jax: 0.10.0
libtpu: 0.0.40
codegen_flags: <defaults>
</compile_context>

<pallas_src>
import math
from functools import partial

import jax
import jax.numpy as jnp
from jax.experimental import pallas as pl
from jax.experimental.pallas import tpu as pltpu


def _vmem_limit_bytes():
    """Generation-aware scoped-VMEM limit: ~3/4 of physical, capped at 100 MiB."""
    cap = 64 * 1024 * 1024            # conservative default (v7x-class VMEM)
    try:
        info = pltpu.get_tpu_info()
        cap = int(getattr(info, "vmem_capacity_bytes", cap))
    except Exception:
        pass
    return min((cap * 3) // 4, 100 * 1024 * 1024)


VMEM_LIMIT = _vmem_limit_bytes()


def _layernorm(x, g, b, eps=1e-5):
    mu = jnp.mean(x, axis=-1, keepdims=True)
    var = jnp.mean((x - mu) ** 2, axis=-1, keepdims=True)
    return (x - mu) * jax.lax.rsqrt(var + eps) * g + b


# ----------------------------------------------------------------------------
# Kernel A: LN1 + Q/K/V projection (Q pre-scaled by 1/sqrt(D)), bf16 outputs
# ----------------------------------------------------------------------------
def _qkv_kernel(x_ref, ln_g_ref, ln_b_ref, wq_ref, wk_ref, wv_ref,
                q_ref, k_ref, v_ref, *, scale):
    h = _layernorm(x_ref[...].astype(jnp.float32), ln_g_ref[...], ln_b_ref[...])
    hb = h.astype(jnp.bfloat16)
    # fold 1/sqrt(D) into Q once: removes a per-score-tile VPU multiply downstream
    q_ref[...] = (jnp.dot(hb, wq_ref[...], preferred_element_type=jnp.float32)
                  * scale).astype(jnp.bfloat16)
    k_ref[...] = jnp.dot(hb, wk_ref[...],
                         preferred_element_type=jnp.float32).astype(jnp.bfloat16)
    v_ref[...] = jnp.dot(hb, wv_ref[...],
                         preferred_element_type=jnp.float32).astype(jnp.bfloat16)


def qkv_project(x, ln_g, ln_b, wq, wk, wv, *, ts=256):
    B, S, D = x.shape
    TS = min(ts, S)
    assert S % TS == 0
    inv = lambda a: pl.BlockSpec(a.shape, lambda b, s: (0, 0),
                                 pipeline_mode=pl.Buffered(1))  # invariant: single-buffer
    tile = pl.BlockSpec((None, TS, D), lambda b, s: (b, s, 0))
    out = jax.ShapeDtypeStruct((B, S, D), jnp.bfloat16)
    return pl.pallas_call(
        partial(_qkv_kernel, scale=1.0 / math.sqrt(D)),
        out_shape=(out, out, out),
        grid=(B, S // TS),
        in_specs=[tile, inv(ln_g), inv(ln_b), inv(wq), inv(wk), inv(wv)],
        out_specs=(tile, tile, tile),
        compiler_params=pltpu.CompilerParams(
            dimension_semantics=("parallel", "parallel"),
            vmem_limit_bytes=VMEM_LIMIT),
    )(x, ln_g, ln_b, wq, wk, wv)


# ----------------------------------------------------------------------------
# Kernel B: flash attention (K/V streamed from HBM, causal loop bound) + Wo + residual
# ----------------------------------------------------------------------------
def _attn_kernel(x_ref, q_ref, k_hbm, v_hbm, wo_ref, o_ref,
                 kbuf, vbuf, sem, m_sc, l_sc, acc_sc, *, tk):
    b = pl.program_id(0)
    qi = pl.program_id(1)
    TQ, D = q_ref.shape
    n_kv = qi + 1                                    # causal: kv tiles 0 .. qi

    def fetch(j, slot):
        k_start = j * tk
        pltpu.make_async_copy(k_hbm.at[b, pl.ds(k_start, tk), :],
                              kbuf.at[slot], sem.at[0, slot]).start()
        pltpu.make_async_copy(v_hbm.at[b, pl.ds(k_start, tk), :],
                              vbuf.at[slot], sem.at[1, slot]).start()

    fetch(0, 0)                                      # prime slot 0

    m_sc[...] = jnp.full(m_sc.shape, -1e30, jnp.float32)
    l_sc[...] = jnp.zeros(l_sc.shape, jnp.float32)
    acc_sc[...] = jnp.zeros(acc_sc.shape, jnp.float32)

    q_b = q_ref[...]                                 # (TQ, D) bf16, already 1/sqrt(D)-scaled
    # local triangular mask, hoisted out of the loop; needed only on the diagonal tile
    tri = (jax.lax.broadcasted_iota(jnp.int32, (TQ, tk), 0)
           >= jax.lax.broadcasted_iota(jnp.int32, (TQ, tk), 1))

    @pl.loop(0, n_kv)
    def _(j):
        slot = j & 1
        pltpu.make_async_copy(k_hbm.at[b, pl.ds(0, tk), :], kbuf.at[slot],
                              sem.at[0, slot]).wait()
        pltpu.make_async_copy(v_hbm.at[b, pl.ds(0, tk), :], vbuf.at[slot],
                              sem.at[1, slot]).wait()

        @pl.when(j + 1 < n_kv)                       # prefetch next kv tile
        def _():
            fetch(j + 1, 1 - slot)

        # last-axis contraction: no explicit transpose of K
        s = jax.lax.dot_general(q_b, kbuf[slot], (((1,), (1,)), ((), ())),
                                preferred_element_type=jnp.float32)
        # causal mask only matters on the diagonal kv tile (j == qi)
        s = jnp.where(jnp.logical_or(j != qi, tri), s, -1e30)
        m_prev = m_sc[...]
        m_new = jnp.maximum(m_prev, jnp.max(s, axis=-1, keepdims=True))
        alpha = jnp.exp(m_prev - m_new)
        p = jnp.exp(s - m_new)
        l_sc[...] = alpha * l_sc[...] + jnp.sum(p, axis=-1, keepdims=True)
        acc_sc[...] = alpha * acc_sc[...] + jnp.dot(
            p.astype(jnp.bfloat16), vbuf[slot], preferred_element_type=jnp.float32)
        m_sc[...] = m_new

    att = acc_sc[...] * pl.reciprocal(l_sc[...], approx=True)
    x1 = x_ref[...].astype(jnp.float32) + jnp.dot(
        att.astype(jnp.bfloat16), wo_ref[...], preferred_element_type=jnp.float32)
    o_ref[...] = x1.astype(o_ref.dtype)


def attention_block(x, q, k, v, wo, *, tq=256):
    # NOTE: tq=256 targets the 256-wide MXU on v6e/v7x; prefer tq=128 on v5e.
    B, S, D = x.shape
    TQ = min(tq, S)
    assert S % TQ == 0
    tile = pl.BlockSpec((None, TQ, D), lambda b, i: (b, i, 0))
    return pl.pallas_call(
        partial(_attn_kernel, tk=TQ),
        out_shape=jax.ShapeDtypeStruct((B, S, D), jnp.bfloat16),
        grid=(B, S // TQ),
        in_specs=[tile, tile,
                  pl.BlockSpec(memory_space=pl.ANY),       # K (full, stays in HBM)
                  pl.BlockSpec(memory_space=pl.ANY),       # V (full, stays in HBM)
                  pl.BlockSpec(wo.shape, lambda b, i: (0, 0),
                               pipeline_mode=pl.Buffered(1))],
        out_specs=tile,
        scratch_shapes=[
            pltpu.VMEM((2, TQ, D), jnp.bfloat16),          # K tile double buffer
            pltpu.VMEM((2, TQ, D), jnp.bfloat16),          # V tile double buffer
            pltpu.SemaphoreType.DMA((2, 2)),
            pltpu.VMEM((TQ, 1), jnp.float32),              # running max
            pltpu.VMEM((TQ, 1), jnp.float32),              # running denom
            pltpu.VMEM((TQ, D), jnp.float32),              # running numerator
        ],
        compiler_params=pltpu.CompilerParams(
            dimension_semantics=("parallel", "parallel"),
            vmem_limit_bytes=VMEM_LIMIT),
    )(x, q, k, v, wo)


# ----------------------------------------------------------------------------
# Kernel C: LN2 + ReLU MLP with dff-tiled ("arbitrary") accumulation + residual
# ----------------------------------------------------------------------------
def _mlp_kernel(x_ref, ln_g_ref, ln_b_ref, w1_ref, b1_ref, w2_ref, b2_ref,
                o_ref, h_sc, y_sc):
    fi = pl.program_id(2)

    @pl.when(fi == 0)
    def _():
        x = x_ref[...].astype(jnp.float32)
        h_sc[...] = _layernorm(x, ln_g_ref[...], ln_b_ref[...]).astype(jnp.bfloat16)
        y_sc[...] = x + b2_ref[...]          # residual + final bias folded into init

    f = jnp.dot(h_sc[...], w1_ref[...],
                preferred_element_type=jnp.float32) + b1_ref[...]
    f = jnp.maximum(f, 0.0)
    y_sc[...] += jnp.dot(f.astype(jnp.bfloat16), w2_ref[...],
                         preferred_element_type=jnp.float32)

    @pl.when(fi == pl.num_programs(2) - 1)
    def _():
        o_ref[...] = y_sc[...].astype(o_ref.dtype)


def mlp_block(x, ln_g, ln_b, w1, b1, w2, b2, *, ts=256, tff=512):
    B, S, D = x.shape
    dff = w1.shape[1]
    TS = min(ts, S)
    TFF = min(tff, dff)
    assert S % TS == 0 and dff % TFF == 0
    inv = lambda a: pl.BlockSpec(a.shape, lambda b, s, f: (0, 0),
                                 pipeline_mode=pl.Buffered(1))
    tile = pl.BlockSpec((None, TS, D), lambda b, s, f: (b, s, 0))
    return pl.pallas_call(
        _mlp_kernel,
        out_shape=jax.ShapeDtypeStruct((B, S, D), jnp.bfloat16),
        grid=(B, S // TS, dff // TFF),
        in_specs=[tile, inv(ln_g), inv(ln_b),
                  pl.BlockSpec((D, TFF), lambda b, s, f: (0, f)),
                  pl.BlockSpec((1, TFF), lambda b, s, f: (0, f)),
                  pl.BlockSpec((TFF, D), lambda b, s, f: (f, 0)),
                  inv(b2)],
        out_specs=tile,
        scratch_shapes=[pltpu.VMEM((TS, D), jnp.bfloat16),   # pre-LN hidden
                        pltpu.VMEM((TS, D), jnp.float32)],   # f32 output accumulator
        compiler_params=pltpu.CompilerParams(
            dimension_semantics=("parallel", "parallel", "arbitrary"),
            vmem_limit_bytes=VMEM_LIMIT),
    )(x, ln_g, ln_b, w1, b1, w2, b2)


# ----------------------------------------------------------------------------
# Head: dmodel -> vocab, sequence- and vocab-tiled, fused ngpt sz scaling
# ----------------------------------------------------------------------------
def _head_kernel(x_ref, wh_ref, sz_ref, o_ref):
    logits = jnp.dot(x_ref[...], wh_ref[...], preferred_element_type=jnp.float32)
    o_ref[...] = (logits * sz_ref[...]).astype(o_ref.dtype)


def head_with_sz(x, w_head, sz_eff, *, ts=512, tv=1024):
    B, S, D = x.shape
    V = w_head.shape[1]
    TS = min(ts, S)
    TV = min(tv, V)
    assert S % TS == 0 and V % TV == 0
    return pl.pallas_call(
        _head_kernel,
        out_shape=jax.ShapeDtypeStruct((B, S, V), jnp.float32),
        grid=(B, S // TS, V // TV),
        in_specs=[pl.BlockSpec((None, TS, D), lambda b, s, v: (b, s, 0)),
                  pl.BlockSpec((D, TV), lambda b, s, v: (0, v)),
                  pl.BlockSpec((1, TV), lambda b, s, v: (0, v))],
        out_specs=pl.BlockSpec((None, TS, TV), lambda b, s, v: (b, s, v)),
        compiler_params=pltpu.CompilerParams(
            dimension_semantics=("parallel", "parallel", "parallel"),
            vmem_limit_bytes=VMEM_LIMIT),
    )(x, w_head, sz_eff)


# ----------------------------------------------------------------------------
# Parameter construction (deterministic, in-script); matmul weights in bf16
# ----------------------------------------------------------------------------
def init_params(key, vocab_size, max_seq, dmodel, dff, n_layers):
    keys = jax.random.split(key, 4 + 8 * n_layers)
    scale = 0.02

    def w(k, shape):
        return (scale * jax.random.normal(k, shape, jnp.float32)).astype(jnp.bfloat16)

    params = {
        "tok_emb": scale * jax.random.normal(keys[0], (vocab_size, dmodel), jnp.float32),
        "pos_emb": scale * jax.random.normal(keys[1], (max_seq, dmodel), jnp.float32),
        "w_head": w(keys[2], (dmodel, vocab_size)),
        "layers": [],
    }
    ki = 4
    for _ in range(n_layers):
        lp = (
            jnp.ones((1, dmodel), jnp.float32),     # ln1 gamma
            jnp.zeros((1, dmodel), jnp.float32),    # ln1 beta
            w(keys[ki + 0], (dmodel, dmodel)),      # wq
            w(keys[ki + 1], (dmodel, dmodel)),      # wk
            w(keys[ki + 2], (dmodel, dmodel)),      # wv
            w(keys[ki + 3], (dmodel, dmodel)),      # wo
            jnp.ones((1, dmodel), jnp.float32),     # ln2 gamma
            jnp.zeros((1, dmodel), jnp.float32),    # ln2 beta
            w(keys[ki + 4], (dmodel, dff)),         # w1
            jnp.zeros((1, dff), jnp.float32),       # b1
            w(keys[ki + 5], (dff, dmodel)),         # w2
            jnp.zeros((1, dmodel), jnp.float32),    # b2
        )
        params["layers"].append(lp)
        ki += 8
    # ngpt sz parameter (per LLM.__init__): full(vocab, sz_init_scaling)
    base_scale = 1.0 / math.sqrt(dmodel)
    params["sz"] = jnp.full((vocab_size,), base_scale, jnp.float32)
    params["sz_init_value"] = 1.0           # args.s_z_init
    params["sz_init_scaling"] = base_scale  # args.s_z_scale is None -> base_scale
    return params


# ----------------------------------------------------------------------------
# Full LLM forward (Pallas) and a pure-JAX reference for verification
# ----------------------------------------------------------------------------
def llm_forward_pallas(token_ids, params, *, use_ngpt=True,
                       tq=256, proj_ts=256, mlp_ts=256, tff=512,
                       head_ts=512, head_tv=1024):
    B, S = token_ids.shape
    # embedding glue: gather + positional add (+ optional ngpt L2-norm, XLA-fused)
    x = params["tok_emb"][token_ids] + params["pos_emb"][:S][None, :, :]
    if use_ngpt:  # F.normalize(x, p=2, dim=-1)
        x = x * jax.lax.rsqrt(
            jnp.maximum(jnp.sum(x * x, axis=-1, keepdims=True), 1e-24))
    x = x.astype(jnp.bfloat16)               # bf16 residual stream between kernels
    for (g1, be1, wq, wk, wv, wo, g2, be2, w1, bb1, w2, bb2) in params["layers"]:
        q, k, v = qkv_project(x, g1, be1, wq, wk, wv, ts=proj_ts)
        x = attention_block(x, q, k, v, wo, tq=tq)
        x = mlp_block(x, g2, be2, w1, bb1, w2, bb2, ts=mlp_ts, tff=tff)
    V = params["w_head"].shape[1]
    if use_ngpt:
        sz_eff = params["sz"] * (params["sz_init_value"] / params["sz_init_scaling"])
    else:
        sz_eff = jnp.ones((V,), jnp.float32)
    return head_with_sz(x, params["w_head"], sz_eff.reshape(1, -1),
                        ts=head_ts, tv=head_tv)


def llm_forward_ref(token_ids, params, *, use_ngpt=True):
    B, S = token_ids.shape
    x = params["tok_emb"][token_ids] + params["pos_emb"][:S][None, :, :]
    if use_ngpt:
        x = x / jnp.maximum(jnp.sqrt(jnp.sum(x * x, axis=-1, keepdims=True)), 1e-12)

    def ln(x, g, b, eps=1e-5):
        mu = jnp.mean(x, axis=-1, keepdims=True)
        var = jnp.mean((x - mu) ** 2, axis=-1, keepdims=True)
        return (x - mu) / jnp.sqrt(var + eps) * g + b

    f32 = lambda a: a.astype(jnp.float32)
    D = x.shape[-1]
    for (g1, be1, wq, wk, wv, wo, g2, be2, w1, bb1, w2, bb2) in params["layers"]:
        h = ln(x, g1, be1)
        q, k, v = h @ f32(wq), h @ f32(wk), h @ f32(wv)
        s = jnp.einsum("bqd,bkd->bqk", q, k) / jnp.sqrt(jnp.float32(D))
        mask = jnp.tril(jnp.ones((S, S), bool))
        s = jnp.where(mask[None], s, -1e30)
        p = jax.nn.softmax(s, axis=-1)
        x = x + jnp.einsum("bqk,bkd->bqd", p, v) @ f32(wo)
        h2 = ln(x, g2, be2)
        x = x + (jnp.maximum(h2 @ f32(w1) + bb1, 0.0) @ f32(w2) + bb2)

    logits = x @ f32(params["w_head"])
    if use_ngpt:
        sz_eff = params["sz"] * (params["sz_init_value"] / params["sz_init_scaling"])
        logits = logits * sz_eff
    return logits


if __name__ == "__main__":
    B, S, D, DFF, V, N_LAYERS = 2, 32, 32, 256, 256, 2

    key = jax.random.PRNGKey(0)
    k_tok, k_par = jax.random.split(key)
    params = init_params(k_par, vocab_size=V, max_seq=S, dmodel=D, dff=DFF,
                         n_layers=N_LAYERS)
    token_ids = jax.random.randint(k_tok, (B, S), 0, V, dtype=jnp.int32)

    # Tiles chosen so every tiling path is exercised at these tiny shapes
    # (multiple q/kv tiles incl. the DMA prefetch branch, two dff accumulation
    # steps, sequence- and vocab-tiled head).  Production defaults are larger.
    out = llm_forward_pallas(token_ids, params, use_ngpt=True,
                             tq=16, proj_ts=16, mlp_ts=16, tff=128,
                             head_ts=16, head_tv=128)
    out = jax.block_until_ready(out)
    assert out.shape == (B, S, V), out.shape

    ref = jax.block_until_ready(llm_forward_ref(token_ids, params, use_ngpt=True))
    # bf16 activations / MXU operands + approx reciprocal => loose-ish tolerance
    err = float(jnp.max(jnp.abs(out - ref)))
    assert jnp.allclose(out, ref, rtol=2e-2, atol=2e-2), err

    print("KERNEL_OK")
</pallas_src>

<mosaic_0001>
module attributes {stable_mosaic.version = 11 : i64} {
  func.func @_qkv_kernel(%arg0: i32, %arg1: i32, %arg2: memref<1x16x32xbf16, #tpu.memory_space<vmem>>, %arg3: memref<1x32xf32, #tpu.memory_space<vmem>>, %arg4: memref<1x32xf32, #tpu.memory_space<vmem>>, %arg5: memref<32x32xbf16, #tpu.memory_space<vmem>>, %arg6: memref<32x32xbf16, #tpu.memory_space<vmem>>, %arg7: memref<32x32xbf16, #tpu.memory_space<vmem>>, %arg8: memref<1x16x32xbf16, #tpu.memory_space<vmem>>, %arg9: memref<1x16x32xbf16, #tpu.memory_space<vmem>>, %arg10: memref<1x16x32xbf16, #tpu.memory_space<vmem>>) attributes {dimension_semantics = [#tpu.dimension_semantics<parallel>, #tpu.dimension_semantics<parallel>], iteration_bounds = array<i64: 2, 2>, scalar_prefetch = 0 : i64, scratch_operands = 0 : i64, tpu.core_type = #tpu.core_type<tc>, window_params = [{transform_indices = @transform_0, window_bounds = array<i64: 1, 16, 32>}, {pipeline_mode = #tpu.pipeline_mode<synchronous>, transform_indices = @transform_1, window_bounds = array<i64: 1, 32>}, {pipeline_mode = #tpu.pipeline_mode<synchronous>, transform_indices = @transform_2, window_bounds = array<i64: 1, 32>}, {pipeline_mode = #tpu.pipeline_mode<synchronous>, transform_indices = @transform_3, window_bounds = array<i64: 32, 32>}, {pipeline_mode = #tpu.pipeline_mode<synchronous>, transform_indices = @transform_4, window_bounds = array<i64: 32, 32>}, {pipeline_mode = #tpu.pipeline_mode<synchronous>, transform_indices = @transform_5, window_bounds = array<i64: 32, 32>}, {transform_indices = @transform_6, window_bounds = array<i64: 1, 16, 32>}, {transform_indices = @transform_7, window_bounds = array<i64: 1, 16, 32>}, {transform_indices = @transform_8, window_bounds = array<i64: 1, 16, 32>}]} {
    %c0 = arith.constant 0 : index
    %c0_0 = arith.constant 0 : index
    %c0_1 = arith.constant 0 : index
    %0 = vector.load %arg2[%c0, %c0_0, %c0_1] : memref<1x16x32xbf16, #tpu.memory_space<vmem>>, vector<1x16x32xbf16>
    %1 = vector.shape_cast %0 : vector<1x16x32xbf16> to vector<16x32xbf16>
    %2 = arith.extf %1 : vector<16x32xbf16> to vector<16x32xf32>
    %c0_2 = arith.constant 0 : index
    %c0_3 = arith.constant 0 : index
    %3 = vector.load %arg3[%c0_2, %c0_3] : memref<1x32xf32, #tpu.memory_space<vmem>>, vector<1x32xf32>
    %c0_4 = arith.constant 0 : index
    %c0_5 = arith.constant 0 : index
    %4 = vector.load %arg4[%c0_4, %c0_5] : memref<1x32xf32, #tpu.memory_space<vmem>>, vector<1x32xf32>
    %cst = arith.constant dense<0.000000e+00> : vector<16xf32>
    %5 = vector.multi_reduction <add>, %2, %cst [1] : vector<16x32xf32> to vector<16xf32>
    %6 = vector.shape_cast %5 : vector<16xf32> to vector<16x1xf32>
    %cst_6 = arith.constant 3.200000e+01 : f32
    %7 = vector.broadcast %cst_6 : f32 to vector<16x1xf32>
    %8 = arith.divf %6, %7 : vector<16x1xf32>
    %9 = vector.broadcast %8 : vector<16x1xf32> to vector<16x32xf32>
    %10 = arith.subf %2, %9 : vector<16x32xf32>
    %11 = arith.mulf %10, %10 : vector<16x32xf32>
    %cst_7 = arith.constant dense<0.000000e+00> : vector<16xf32>
    %12 = vector.multi_reduction <add>, %11, %cst_7 [1] : vector<16x32xf32> to vector<16xf32>
    %13 = vector.shape_cast %12 : vector<16xf32> to vector<16x1xf32>
    %cst_8 = arith.constant 3.200000e+01 : f32
    %14 = vector.broadcast %cst_8 : f32 to vector<16x1xf32>
    %15 = arith.divf %13, %14 : vector<16x1xf32>
    %16 = vector.broadcast %8 : vector<16x1xf32> to vector<16x32xf32>
    %17 = arith.subf %2, %16 : vector<16x32xf32>
    %cst_9 = arith.constant 9.99999974E-6 : f32
    %18 = vector.broadcast %cst_9 : f32 to vector<16x1xf32>
    %19 = arith.addf %15, %18 : vector<16x1xf32>
    %20 = math.rsqrt %19 : vector<16x1xf32>
    %21 = vector.broadcast %20 : vector<16x1xf32> to vector<16x32xf32>
    %22 = arith.mulf %17, %21 : vector<16x32xf32>
    %23 = vector.broadcast %3 : vector<1x32xf32> to vector<16x32xf32>
    %24 = arith.mulf %22, %23 : vector<16x32xf32>
    %25 = vector.broadcast %4 : vector<1x32xf32> to vector<16x32xf32>
    %26 = arith.addf %24, %25 : vector<16x32xf32>
    %27 = arith.truncf %26 : vector<16x32xf32> to vector<16x32xbf16>
    %c0_10 = arith.constant 0 : index
    %c0_11 = arith.constant 0 : index
    %28 = vector.load %arg5[%c0_10, %c0_11] : memref<32x32xbf16, #tpu.memory_space<vmem>>, vector<32x32xbf16>
    %cst_12 = arith.constant dense<0.000000e+00> : vector<16x32xf32>
    %29 = tpu.matmul %27, %28, %cst_12 {dimension_numbers = #tpu.dot_dimension_numbers<[1], [0], [0], [1], [0, 0, 1, 1], [], []>} : vector<16x32xbf16>, vector<32x32xbf16>, vector<16x32xf32> -> vector<16x32xf32>
    %cst_13 = arith.constant 0.176776692 : f32
    %30 = vector.broadcast %cst_13 : f32 to vector<16x32xf32>
    %31 = arith.mulf %29, %30 : vector<16x32xf32>
    %32 = arith.truncf %31 : vector<16x32xf32> to vector<16x32xbf16>
    %c0_14 = arith.constant 0 : index
    %c0_15 = arith.constant 0 : index
    %c0_16 = arith.constant 0 : index
    %33 = vector.load %arg8[%c0_14, %c0_15, %c0_16] : memref<1x16x32xbf16, #tpu.memory_space<vmem>>, vector<1x16x32xbf16>
    %34 = vector.shape_cast %33 : vector<1x16x32xbf16> to vector<16x32xbf16>
    %35 = vector.shape_cast %32 : vector<16x32xbf16> to vector<1x16x32xbf16>
    tpu.vector_store %arg8[%c0_14, %c0_15, %c0_16], %35 {strides = array<i32>} : memref<1x16x32xbf16, #tpu.memory_space<vmem>>, vector<1x16x32xbf16>,
    %c0_17 = arith.constant 0 : index
    %c0_18 = arith.constant 0 : index
    %36 = vector.load %arg6[%c0_17, %c0_18] : memref<32x32xbf16, #tpu.memory_space<vmem>>, vector<32x32xbf16>
    %cst_19 = arith.constant dense<0.000000e+00> : vector<16x32xf32>
    %37 = tpu.matmul %27, %36, %cst_19 {dimension_numbers = #tpu.dot_dimension_numbers<[1], [0], [0], [1], [0, 0, 1, 1], [], []>} : vector<16x32xbf16>, vector<32x32xbf16>, vector<16x32xf32> -> vector<16x32xf32>
    %38 = arith.truncf %37 : vector<16x32xf32> to vector<16x32xbf16>
    %c0_20 = arith.constant 0 : index
    %c0_21 = arith.constant 0 : index
    %c0_22 = arith.constant 0 : index
    %39 = vector.load %arg9[%c0_20, %c0_21, %c0_22] : memref<1x16x32xbf16, #tpu.memory_space<vmem>>, vector<1x16x32xbf16>
    %40 = vector.shape_cast %39 : vector<1x16x32xbf16> to vector<16x32xbf16>
    %41 = vector.shape_cast %38 : vector<16x32xbf16> to vector<1x16x32xbf16>
    tpu.vector_store %arg9[%c0_20, %c0_21, %c0_22], %41 {strides = array<i32>} : memref<1x16x32xbf16, #tpu.memory_space<vmem>>, vector<1x16x32xbf16>,
    %c0_23 = arith.constant 0 : index
    %c0_24 = arith.constant 0 : index
    %42 = vector.load %arg7[%c0_23, %c0_24] : memref<32x32xbf16, #tpu.memory_space<vmem>>, vector<32x32xbf16>
    %cst_25 = arith.constant dense<0.000000e+00> : vector<16x32xf32>
    %43 = tpu.matmul %27, %42, %cst_25 {dimension_numbers = #tpu.dot_dimension_numbers<[1], [0], [0], [1], [0, 0, 1, 1], [], []>} : vector<16x32xbf16>, vector<32x32xbf16>, vector<16x32xf32> -> vector<16x32xf32>
    %44 = arith.truncf %43 : vector<16x32xf32> to vector<16x32xbf16>
    %c0_26 = arith.constant 0 : index
    %c0_27 = arith.constant 0 : index
    %c0_28 = arith.constant 0 : index
    %45 = vector.load %arg10[%c0_26, %c0_27, %c0_28] : memref<1x16x32xbf16, #tpu.memory_space<vmem>>, vector<1x16x32xbf16>
    %46 = vector.shape_cast %45 : vector<1x16x32xbf16> to vector<16x32xbf16>
    %47 = vector.shape_cast %44 : vector<16x32xbf16> to vector<1x16x32xbf16>
    tpu.vector_store %arg10[%c0_26, %c0_27, %c0_28], %47 {strides = array<i32>} : memref<1x16x32xbf16, #tpu.memory_space<vmem>>, vector<1x16x32xbf16>,
    return
  }
  func.func @transform_0(%arg0: i32, %arg1: i32) -> (i32, i32, i32) {
    %c0_i32 = arith.constant 0 : i32
    %c0_i32_0 = arith.constant 0 : i32
    return %arg0, %arg1, %c0_i32 : i32, i32, i32
  }
  func.func @transform_1(%arg0: i32, %arg1: i32) -> (i32, i32) {
    %c0_i32 = arith.constant 0 : i32
    %c0_i32_0 = arith.constant 0 : i32
    %c0_i32_1 = arith.constant 0 : i32
    return %c0_i32, %c0_i32_0 : i32, i32
  }
  func.func @transform_2(%arg0: i32, %arg1: i32) -> (i32, i32) {
    %c0_i32 = arith.constant 0 : i32
    %c0_i32_0 = arith.constant 0 : i32
    %c0_i32_1 = arith.constant 0 : i32
    return %c0_i32, %c0_i32_0 : i32, i32
  }
  func.func @transform_3(%arg0: i32, %arg1: i32) -> (i32, i32) {
    %c0_i32 = arith.constant 0 : i32
    %c0_i32_0 = arith.constant 0 : i32
    %c0_i32_1 = arith.constant 0 : i32
    return %c0_i32, %c0_i32_0 : i32, i32
  }
  func.func @transform_4(%arg0: i32, %arg1: i32) -> (i32, i32) {
    %c0_i32 = arith.constant 0 : i32
    %c0_i32_0 = arith.constant 0 : i32
    %c0_i32_1 = arith.constant 0 : i32
    return %c0_i32, %c0_i32_0 : i32, i32
  }
  func.func @transform_5(%arg0: i32, %arg1: i32) -> (i32, i32) {
    %c0_i32 = arith.constant 0 : i32
    %c0_i32_0 = arith.constant 0 : i32
    %c0_i32_1 = arith.constant 0 : i32
    return %c0_i32, %c0_i32_0 : i32, i32
  }
  func.func @transform_6(%arg0: i32, %arg1: i32) -> (i32, i32, i32) {
    %c0_i32 = arith.constant 0 : i32
    %c0_i32_0 = arith.constant 0 : i32
    return %arg0, %arg1, %c0_i32 : i32, i32, i32
  }
  func.func @transform_7(%arg0: i32, %arg1: i32) -> (i32, i32, i32) {
    %c0_i32 = arith.constant 0 : i32
    %c0_i32_0 = arith.constant 0 : i32
    return %arg0, %arg1, %c0_i32 : i32, i32, i32
  }
  func.func @transform_8(%arg0: i32, %arg1: i32) -> (i32, i32, i32) {
    %c0_i32 = arith.constant 0 : i32
    %c0_i32_0 = arith.constant 0 : i32
    return %arg0, %arg1, %c0_i32 : i32, i32, i32
  }
}

</mosaic_0001>

<llo_original>
// kernel: tpu_custom_call.1
$region0: #{tpu_custom_call.1}
  #allocation0 [shape = 'u32[]', space=smem, size = 0x4, offset = 0x4, fixed_abs, tag = 'smem constant byte address 0x4 - core index']
  #allocation1 [shape = 'u32[144,128]{1,0:T(1,128)}', space=vmem, size = 0x12000, scoped, tag = 'internal scratch']
  %s0 = inlined_call_operand.hbm [shape: bf16[2,32,32], index: 0, kind: input, shape index: {}]
  %s1 = inlined_call_operand.vmem [shape: f32[1,32], index: 1, kind: input, shape index: {}]
  %s2 = inlined_call_operand.vmem [shape: f32[1,32], index: 2, kind: input, shape index: {}]
  %s3 = inlined_call_operand.hbm [shape: bf16[32,32], index: 3, kind: input, shape index: {}]
  %s4 = inlined_call_operand.hbm [shape: bf16[32,32], index: 4, kind: input, shape index: {}]
  %s5 = inlined_call_operand.vmem [shape: bf16[32,32], index: 5, kind: input, shape index: {}]
  %s6 = inlined_call_operand.hbm [shape: bf16[2,32,32], index: 6, kind: output, shape index: {0}]
  %s7 = inlined_call_operand.hbm [shape: bf16[2,32,32], index: 7, kind: output, shape index: {1}]
  %s8 = inlined_call_operand.hbm [shape: bf16[2,32,32], index: 8, kind: output, shape index: {2}]
  %9 = xla_tuple %s6, %s7, %s8
  %s10 = sld [smem:[#allocation0]]
  $region85: #{tpu_custom_call.1} parent=0
    _
  %s12 = ssub.s32 1, %s10
  %s13 = scalar_select 0, %s12, %s10
  $region1: #{tpu_custom_call.1} parent=0
    #allocation2 [shape = 'u8[8192]{0}', space=vmem, size = 0x2000, scoped, tag = 'input window, operand 0']
    #allocation3 [shape = 's32[2]{0}', space=sflag, size = 0x8, scoped, tag = 'scoped memory for tpu_custom_call.1']
    #allocation4 [shape = 's32[2]{0}', space=sflag, size = 0x8, scoped, tag = 'scoped memory for tpu_custom_call.1']
    #allocation5 [shape = 'u8[8192]{0}', space=vmem, size = 0x2000, scoped, tag = 'input window, operand 3, single buffered']
    #allocation6 [shape = 's32[1]{0}', space=sflag, size = 0x4, scoped, tag = 'scoped memory for tpu_custom_call.1']
    #allocation7 [shape = 'u8[8192]{0}', space=vmem, size = 0x2000, scoped, tag = 'input window, operand 4, single buffered']
    #allocation8 [shape = 'u8[8192]{0}', space=vmem, size = 0x2000, scoped, tag = 'output window, operand 0']
    #allocation9 [shape = 'u8[8192]{0}', space=vmem, size = 0x2000, scoped, tag = 'output window, operand 1']
    #allocation10 [shape = 's32[2]{0}', space=sflag, size = 0x8, scoped, tag = 'scoped memory for tpu_custom_call.1']
    #allocation11 [shape = 'u8[8192]{0}', space=vmem, size = 0x2000, scoped, tag = 'output window, operand 2']
    %14 = vsyncpa [#allocation3], 0
    %s15 = scalar_lea.sflag [#allocation3], 1
    %16 = vsyncpa %s15, 0
    %17 = vsyncpa [#allocation6], 0
    %18 = vsyncpa [#allocation4], 0
    %s19 = scalar_lea.sflag [#allocation4], 1
    %20 = vsyncpa %s19, 0
    %21 = vsyncpa [#allocation10], 0
    %s22 = scalar_lea.sflag [#allocation10], 1
    %23 = vsyncpa %s22, 0
    loop: start=0, step=1, limit=6
    $region2: #{tpu_custom_call.1} parent=1 // loop_pre_header
      _
    $region3: #{tpu_custom_call.1} parent=1 // loop_header
      %s25 = sphi 0, %s29
      %p26 = scmp.ge.s32.totalorder %s25, 6
      %s32 = sphi 0, %s44
      %s33 = sphi 0, %s40
      %s34 = sphi 0, %s32
      %s35 = sphi 0, %s33
      %s36 = sphi 0, %s34
      %s37 = sphi 0, %s35
      %s49 = sphi 0, %s51
      %s52 = sphi 0, %s49
      %s53 = sphi 0, %s52
      %s69 = sphi 0, %s53
      %s73 = sphi 0, %s73
      %s75 = sphi 0, %s73
      %s76 = sphi 0, %s75
      %s90 = sphi 0, %s76
      %s94 = sphi 0, %s94
      %s96 = sphi 0, %s94
      %s97 = sphi 0, %s96
      %s111 = sphi 0, %s97
      %s115 = sphi 0, %s115
      %s117 = sphi 0, %s115
      %s118 = sphi 0, %s117
      %s132 = sphi 0, %s118
      %s136 = sphi 0, %s136
      %s138 = sphi 0, %s136
      %s139 = sphi 0, %s138
      %s153 = sphi 0, %s139
      %s157 = sphi 0, %s157
      %s159 = sphi 0, %s157
      %s160 = sphi 0, %s159
      %s174 = sphi 0, %s160
      %s182 = sphi 0, %s184
      %s185 = sphi 0, %s182
      %s186 = sphi 0, %s185
      %s202 = sphi 0, %s186
      %s210 = sphi 0, %s212
      %s213 = sphi 0, %s210
      %s214 = sphi 0, %s213
      %s230 = sphi 0, %s214
      %s238 = sphi 0, %s240
      %s241 = sphi 0, %s238
      %s242 = sphi 0, %s241
      %s258 = sphi 0, %s242
    $region4: #{tpu_custom_call.1} parent=1 // loop_header_branch
      %28 = sbr.rel (%p26) target = $region8
    $region5: #{tpu_custom_call.1} parent=1 // loop_body
      %s30 = ssub.s32 %s25, 1
      %s31 = ssub.s32 %s25, 2
      %s38 = sadd.s32 1, %s33
      %p39 = scmp.ge.s32.totalorder %s38, 2
      %s40 = scalar_select %p39, 0, %s38
      %s41 = sadd.s32 1, %s32
      %s42 = scalar_select %p39, %s41, %s32
      %p43 = scmp.ge.s32.totalorder %s42, 2
      %s44 = scalar_select %p43, 0, %s42
      %s45 = ssub.s32 %s32, %s44
      %s46 = ssub.s32 %s33, %s40
      %s47 = sor.u32 %s45, %s46
      %p48 = scmp.eq.s32.totalorder %s47, 0
      %s50 = sadd.s32 %s49, 1
      %s51 = scalar_select %p48, %s49, %s50
      %p54 = pneg %p48
      %p55 = scmp.eq.s32.totalorder %s25, 3
      %p56 = por %p54, %p55
      %p57 = scmp.ne.s32.totalorder %s49, %s52
      %p58 = scmp.eq.s32.totalorder %s25, 0
      %p59 = por %p57, %p58
      %p60 = scmp.ne.s32.totalorder %s49, %s52
      %p61 = scmp.eq.s32.totalorder %s30, 3
      %p62 = por %p60, %p61
      %p63 = scmp.ne.s32.totalorder %s52, %s53
      %p64 = scmp.eq.s32.totalorder %s30, 0
      %p65 = por %p63, %p64
      %p66 = scmp.ne.s32.totalorder %s52, %s53
      %p67 = scmp.eq.s32.totalorder %s31, 3
      %p68 = por %p66, %p67
      %p70 = scmp.ne.s32.totalorder %s53, %s69
      %p71 = scmp.eq.s32.totalorder %s31, 0
      %p72 = por %p70, %p71
      %s74 = sadd.s32 %s73, 1
      %p77 = scmp.eq.s32.totalorder %s25, 3
      %p78 = scmp.ne.s32.totalorder %s73, %s75
      %p79 = scmp.eq.s32.totalorder %s25, 0
      %p80 = por %p78, %p79
      %p81 = scmp.ne.s32.totalorder %s73, %s75
      %p82 = scmp.eq.s32.totalorder %s30, 3
      %p83 = por %p81, %p82
      %p84 = scmp.ne.s32.totalorder %s75, %s76
      %p85 = scmp.eq.s32.totalorder %s30, 0
      %p86 = por %p84, %p85
      %p87 = scmp.ne.s32.totalorder %s75, %s76
      %p88 = scmp.eq.s32.totalorder %s31, 3
      %p89 = por %p87, %p88
      %p91 = scmp.ne.s32.totalorder %s76, %s90
      %p92 = scmp.eq.s32.totalorder %s31, 0
      %p93 = por %p91, %p92
      %s95 = sadd.s32 %s94, 1
      %p98 = scmp.eq.s32.totalorder %s25, 3
      %p99 = scmp.ne.s32.totalorder %s94, %s96
      %p100 = scmp.eq.s32.totalorder %s25, 0
      %p101 = por %p99, %p100
      %p102 = scmp.ne.s32.totalorder %s94, %s96
      %p103 = scmp.eq.s32.totalorder %s30, 3
      %p104 = por %p102, %p103
      %p105 = scmp.ne.s32.totalorder %s96, %s97
      %p106 = scmp.eq.s32.totalorder %s30, 0
      %p107 = por %p105, %p106
      %p108 = scmp.ne.s32.totalorder %s96, %s97
      %p109 = scmp.eq.s32.totalorder %s31, 3
      %p110 = por %p108, %p109
      %p112 = scmp.ne.s32.totalorder %s97, %s111
      %p113 = scmp.eq.s32.totalorder %s31, 0
      %p114 = por %p112, %p113
      %s116 = sadd.s32 %s115, 1
      %p119 = scmp.eq.s32.totalorder %s25, 3
      %p120 = scmp.ne.s32.totalorder %s115, %s117
      %p121 = scmp.eq.s32.totalorder %s25, 0
      %p122 = por %p120, %p121
      %p123 = scmp.ne.s32.totalorder %s115, %s117
      %p124 = scmp.eq.s32.totalorder %s30, 3
      %p125 = por %p123, %p124
      %p126 = scmp.ne.s32.totalorder %s117, %s118
      %p127 = scmp.eq.s32.totalorder %s30, 0
      %p128 = por %p126, %p127
      %p129 = scmp.ne.s32.totalorder %s117, %s118
      %p130 = scmp.eq.s32.totalorder %s31, 3
      %p131 = por %p129, %p130
      %p133 = scmp.ne.s32.totalorder %s118, %s132
      %p134 = scmp.eq.s32.totalorder %s31, 0
      %p135 = por %p133, %p134
      %s137 = sadd.s32 %s136, 1
      %p140 = scmp.eq.s32.totalorder %s25, 3
      %p141 = scmp.ne.s32.totalorder %s136, %s138
      %p142 = scmp.eq.s32.totalorder %s25, 0
      %p143 = por %p141, %p142
      %p144 = scmp.ne.s32.totalorder %s136, %s138
      %p145 = scmp.eq.s32.totalorder %s30, 3
      %p146 = por %p144, %p145
      %p147 = scmp.ne.s32.totalorder %s138, %s139
      %p148 = scmp.eq.s32.totalorder %s30, 0
      %p149 = por %p147, %p148
      %p150 = scmp.ne.s32.totalorder %s138, %s139
      %p151 = scmp.eq.s32.totalorder %s31, 3
      %p152 = por %p150, %p151
      %p154 = scmp.ne.s32.totalorder %s139, %s153
      %p155 = scmp.eq.s32.totalorder %s31, 0
      %p156 = por %p154, %p155
      %s158 = sadd.s32 %s157, 1
      %p161 = scmp.eq.s32.totalorder %s25, 3
      %p162 = scmp.ne.s32.totalorder %s157, %s159
      %p163 = scmp.eq.s32.totalorder %s25, 0
      %p164 = por %p162, %p163
      %p165 = scmp.ne.s32.totalorder %s157, %s159
      %p166 = scmp.eq.s32.totalorder %s30, 3
      %p167 = por %p165, %p166
      %p168 = scmp.ne.s32.totalorder %s159, %s160
      %p169 = scmp.eq.s32.totalorder %s30, 0
      %p170 = por %p168, %p169
      %p171 = scmp.ne.s32.totalorder %s159, %s160
      %p172 = scmp.eq.s32.totalorder %s31, 3
      %p173 = por %p171, %p172
      %p175 = scmp.ne.s32.totalorder %s160, %s174
      %p176 = scmp.eq.s32.totalorder %s31, 0
      %p177 = por %p175, %p176
      %s178 = ssub.s32 %s32, %s44
      %s179 = ssub.s32 %s33, %s40
      %s180 = sor.u32 %s178, %s179
      %p181 = scmp.eq.s32.totalorder %s180, 0
      %s183 = sadd.s32 %s182, 1
      %s184 = scalar_select %p181, %s182, %s183
      %p187 = pneg %p181
      %p188 = scmp.eq.s32.totalorder %s25, 3
      %p189 = por %p187, %p188
      %p190 = scmp.ne.s32.totalorder %s182, %s185
      %p191 = scmp.eq.s32.totalorder %s25, 0
      %p192 = por %p190, %p191
      %p193 = scmp.ne.s32.totalorder %s182, %s185
      %p194 = scmp.eq.s32.totalorder %s30, 3
      %p195 = por %p193, %p194
      %p196 = scmp.ne.s32.totalorder %s185, %s186
      %p197 = scmp.eq.s32.totalorder %s30, 0
      %p198 = por %p196, %p197
      %p199 = scmp.ne.s32.totalorder %s185, %s186
      %p200 = scmp.eq.s32.totalorder %s31, 3
      %p201 = por %p199, %p200
      %p203 = scmp.ne.s32.totalorder %s186, %s202
      %p204 = scmp.eq.s32.totalorder %s31, 0
      %p205 = por %p203, %p204
      %s206 = ssub.s32 %s32, %s44
      %s207 = ssub.s32 %s33, %s40
      %s208 = sor.u32 %s206, %s207
      %p209 = scmp.eq.s32.totalorder %s208, 0
      %s211 = sadd.s32 %s210, 1
      %s212 = scalar_select %p209, %s210, %s211
      %p215 = pneg %p209
      %p216 = scmp.eq.s32.totalorder %s25, 3
      %p217 = por %p215, %p216
      %p218 = scmp.ne.s32.totalorder %s210, %s213
      %p219 = scmp.eq.s32.totalorder %s25, 0
      %p220 = por %p218, %p219
      %p221 = scmp.ne.s32.totalorder %s210, %s213
      %p222 = scmp.eq.s32.totalorder %s30, 3
      %p223 = por %p221, %p222
      %p224 = scmp.ne.s32.totalorder %s213, %s214
      %p225 = scmp.eq.s32.totalorder %s30, 0
      %p226 = por %p224, %p225
      %p227 = scmp.ne.s32.totalorder %s213, %s214
      %p228 = scmp.eq.s32.totalorder %s31, 3
      %p229 = por %p227, %p228
      %p231 = scmp.ne.s32.totalorder %s214, %s230
      %p232 = scmp.eq.s32.totalorder %s31, 0
      %p233 = por %p231, %p232
      %s234 = ssub.s32 %s32, %s44
      %s235 = ssub.s32 %s33, %s40
      %s236 = sor.u32 %s234, %s235
      %p237 = scmp.eq.s32.totalorder %s236, 0
      %s239 = sadd.s32 %s238, 1
      %s240 = scalar_select %p237, %s238, %s239
      %p243 = pneg %p237
      %p244 = scmp.eq.s32.totalorder %s25, 3
      %p245 = por %p243, %p244
      %p246 = scmp.ne.s32.totalorder %s238, %s241
      %p247 = scmp.eq.s32.totalorder %s25, 0
      %p248 = por %p246, %p247
      %p249 = scmp.ne.s32.totalorder %s238, %s241
      %p250 = scmp.eq.s32.totalorder %s30, 3
      %p251 = por %p249, %p250
      %p252 = scmp.ne.s32.totalorder %s241, %s242
      %p253 = scmp.eq.s32.totalorder %s30, 0
      %p254 = por %p252, %p253
      %p255 = scmp.ne.s32.totalorder %s241, %s242
      %p256 = scmp.eq.s32.totalorder %s31, 3
      %p257 = por %p255, %p256
      %p259 = scmp.ne.s32.totalorder %s242, %s258
      %p260 = scmp.eq.s32.totalorder %s31, 0
      %p261 = por %p259, %p260
      %p262 = scmp.le.s32.totalorder 1, %s25
      %p263 = scmp.lt.s32.totalorder %s25, 5
      %p264 = pnand %p262, %p263
      %p265 = pneg %p264
      // Predicated region
      $region9: #{tpu_custom_call.1} parent=5 // pred_check
        _
      $region10: #{tpu_custom_call.1} parent=5 // pred_check_branch
        %267 = sbr.rel (%p264) target = $region12
      $region11: #{tpu_custom_call.1} parent=5 // pred_region
        %s268 = ssub.s32 %s25, 1
        // Predicated region
        $region13: #{tpu_custom_call.1} parent=11 // pred_check
          %p269 = pneg %p86
        $region14: #{tpu_custom_call.1} parent=11 // pred_check_branch
          %271 = sbr.rel (%p269) target = $region16
        $region15: #{tpu_custom_call.1} parent=11 // pred_region
          _
        $region16: #{tpu_custom_call.1} parent=11 // pred_fallthru
          _
        // Predicated region
        $region17: #{tpu_custom_call.1} parent=11 // pred_check
          %p272 = pneg %p107
        $region18: #{tpu_custom_call.1} parent=11 // pred_check_branch
          %274 = sbr.rel (%p272) target = $region20
        $region19: #{tpu_custom_call.1} parent=11 // pred_region
          _
        $region20: #{tpu_custom_call.1} parent=11 // pred_fallthru
          _
        // Predicated region
        $region21: #{tpu_custom_call.1} parent=11 // pred_check
          %p275 = pneg %p128
        $region22: #{tpu_custom_call.1} parent=11 // pred_check_branch
          %277 = sbr.rel (%p275) target = $region24
        $region23: #{tpu_custom_call.1} parent=11 // pred_region
          %s279 = ssub.s32 256, 256
          %280 = vsyncadd [#allocation6], %s279
          %s281 = sshll.u32 [#allocation5], 4
          %s282 = int_to_ptr.vmem [resolvable:$true] %s281
          %287 = dma.hbm_to_vmem [thread:$0]  %s3, 256, %s282, [#allocation6], 64, 64, 4
        $region24: #{tpu_custom_call.1} parent=11 // pred_fallthru
          _
        // Predicated region
        $region25: #{tpu_custom_call.1} parent=11 // pred_check
          %p288 = pneg %p149
        $region26: #{tpu_custom_call.1} parent=11 // pred_check_branch
          %290 = sbr.rel (%p288) target = $region28
        $region27: #{tpu_custom_call.1} parent=11 // pred_region
          %s292 = ssub.s32 256, 256
          %293 = vsyncadd [#allocation6], %s292
          %s294 = sshll.u32 [#allocation7], 4
          %s295 = int_to_ptr.vmem [resolvable:$true] %s294
          %300 = dma.hbm_to_vmem [thread:$0]  %s4, 256, %s295, [#allocation6], 64, 64, 4
        $region28: #{tpu_custom_call.1} parent=11 // pred_fallthru
          _
        // Predicated region
        $region29: #{tpu_custom_call.1} parent=11 // pred_check
          %p301 = pneg %p170
        $region30: #{tpu_custom_call.1} parent=11 // pred_check_branch
          %303 = sbr.rel (%p301) target = $region32
        $region31: #{tpu_custom_call.1} parent=11 // pred_region
          _
        $region32: #{tpu_custom_call.1} parent=11 // pred_fallthru
          _
      $region12: #{tpu_custom_call.1} parent=5 // pred_fallthru
        _
      %p304 = scmp.lt.s32.totalorder %s25, 4
      // Predicated region
      $region33: #{tpu_custom_call.1} parent=5 // pred_check
        %p305 = pneg %p304
      $region34: #{tpu_custom_call.1} parent=5 // pred_check_branch
        %307 = sbr.rel (%p305) target = $region36
      $region35: #{tpu_custom_call.1} parent=5 // pred_region
        // Predicated region
        $region37: #{tpu_custom_call.1} parent=35 // pred_check
          %p308 = pneg %p59
        $region38: #{tpu_custom_call.1} parent=35 // pred_check_branch
          %310 = sbr.rel (%p308) target = $region40
        $region39: #{tpu_custom_call.1} parent=35 // pred_region
          %s311 = sand.u32 %s49, 1
          %s312 = scalar_lea.sflag [#allocation3], %s311
          %s313 = sand.u32 %s49, 1
          %s314 = smul.addr %s313, 8
          %s315 = scalar_lea.vmem [#allocation2], %s314
          %s316 = smul.u32 2, %s33
          %s318 = ssub.s32 128, 128
          %319 = vsyncadd %s312, %s318
          %s320 = smul.addr %s32, 4
          %s321 = sadd.s32 %s316, %s320
          %s322 = smul.addr %s321, 64
          %s323 = scalar_lea.hbm %s0, %s322
          %s324 = sshll.u32 %s315, 4
          %s325 = int_to_ptr.vmem [resolvable:$true] %s324
          %330 = dma.hbm_to_vmem [thread:$0]  %s323, 128, %s325, %s312, 64, 64, 4
        $region40: #{tpu_custom_call.1} parent=35 // pred_fallthru
          _
      $region36: #{tpu_custom_call.1} parent=5 // pred_fallthru
        _
      %p331 = scmp.le.s32.totalorder 1, %s25
      %p332 = scmp.lt.s32.totalorder %s25, 5
      %p333 = pnand %p331, %p332
      %p334 = pneg %p333
      // Predicated region
      $region41: #{tpu_custom_call.1} parent=5 // pred_check
        _
      $region42: #{tpu_custom_call.1} parent=5 // pred_check_branch
        %336 = sbr.rel (%p333) target = $region44
      $region43: #{tpu_custom_call.1} parent=5 // pred_region
        %s337 = ssub.s32 %s25, 1
        %s338 = sand.u32 %s52, 1
        %s339 = scalar_lea.sflag [#allocation3], %s338
        %s340 = sand.u32 %s52, 1
        %s341 = smul.addr %s340, 8
        %s342 = scalar_lea.vmem [#allocation2], %s341
        // Predicated region
        $region45: #{tpu_custom_call.1} parent=43 // pred_check
          %p343 = pneg %p65
        $region46: #{tpu_custom_call.1} parent=43 // pred_check_branch
          %345 = sbr.rel (%p343) target = $region48
        $region47: #{tpu_custom_call.1} parent=43 // pred_region
          %346 = dma.done %s339, 128
        $region48: #{tpu_custom_call.1} parent=43 // pred_fallthru
          _
        // Predicated region
        $region49: #{tpu_custom_call.1} parent=43 // pred_check
          %p347 = pneg %p128
        $region50: #{tpu_custom_call.1} parent=43 // pred_check_branch
          %349 = sbr.rel (%p347) target = $region52
        $region51: #{tpu_custom_call.1} parent=43 // pred_region
          %350 = dma.done [#allocation6], 256
        $region52: #{tpu_custom_call.1} parent=43 // pred_fallthru
          _
        // Predicated region
        $region53: #{tpu_custom_call.1} parent=43 // pred_check
          %p351 = pneg %p149
        $region54: #{tpu_custom_call.1} parent=43 // pred_check_branch
          %353 = sbr.rel (%p351) target = $region56
        $region55: #{tpu_custom_call.1} parent=43 // pred_region
          %354 = dma.done [#allocation6], 256
        $region56: #{tpu_custom_call.1} parent=43 // pred_fallthru
          _
        %s355 = sand.u32 %s52, 1
        %s356 = scalar_lea.sflag [#allocation3], %s355
        %s357 = sand.u32 %s52, 1
        %s358 = smul.addr %s357, 8
        %s359 = scalar_lea.vmem [#allocation2], %s358
        %p360 = pneg %p65
        %p361 = pneg %p62
        %p362 = pneg %p86
        %p363 = pneg %p83
        %p364 = pneg %p107
        %p365 = pneg %p104
        %p366 = pneg %p128
        %p367 = pneg %p125
        %p368 = pneg %p149
        %p369 = pneg %p146
        %p370 = pneg %p170
        %p371 = pneg %p167
        %p372 = pneg %p198
        %p373 = pneg %p195
        %s374 = sand.u32 %s185, 1
        %s375 = scalar_lea.sflag [#allocation4], %s374
        %s376 = sand.u32 %s185, 1
        %s377 = smul.addr %s376, 8
        %s378 = scalar_lea.vmem [#allocation8], %s377
        %p379 = pneg %p226
        %p380 = pneg %p223
        %s381 = sand.u32 %s30, 1
        %s382 = scalar_lea.sflag [#allocation10], %s381
        %s383 = sand.u32 %s213, 1
        %s384 = smul.addr %s383, 8
        %s385 = scalar_lea.vmem [#allocation9], %s384
        %p386 = pneg %p254
        %p387 = pneg %p251
        %s388 = sand.u32 %s30, 1
        %s389 = scalar_lea.sflag [#allocation10], %s388
        %s390 = sand.u32 %s241, 1
        %s391 = smul.addr %s390, 8
        %s392 = scalar_lea.vmem [#allocation11], %s391
        %s393 = smul.u32 2, %s35
        %s394 = smul.u32 2, %s35
        %s395 = smul.u32 2, %s35
        %s396 = smul.u32 2, %s35
        %v398 = vld [vmem:[%s342] sm:$0xf]
        %v399 = vld [vmem:[%s342 + $0x4] sm:$0xf]
        %v400 = vunpack.c.l.bf16 %v398
        %v401 = vunpack.c.l.bf16 %v399
        %v402 = vld [vmem:[%s1] sm:$0x1]
        %v403 = vld [vmem:[%s2] sm:$0x1]
        %vm404 = vcmask 261120
        %v405 = vsel %vm404, %v400, 0.0
        %406 = vadd.xlane.f32.xlu0 %v405
        %v407 = vpop.xlane.xlu0 %406
        %v408 = vsel %vm404, %v401, 0.0
        %409 = vadd.xlane.f32.xlu0 %v408
        %v410 = vpop.xlane.xlu0 %409
        %v411 = vrcp.pop 32.0
        %v412 = vmul.f32 %v407, %v411
        %v413 = vmul.f32 %v410, %v411
        %v414 = vsub.f32 %v400, %v412
        %v415 = vsub.f32 %v401, %v413
        %v416 = vmul.f32 %v414, %v414
        %v417 = vmul.f32 %v415, %v415
        %v418 = vsel %vm404, %v416, 0.0
        %419 = vadd.xlane.f32.xlu0 %v418
        %v420 = vpop.xlane.xlu0 %419
        %v421 = vsel %vm404, %v417, 0.0
        %422 = vadd.xlane.f32.xlu0 %v421
        %v423 = vpop.xlane.xlu0 %422
        %v424 = vmul.f32 %v420, %v411
        %v425 = vmul.f32 %v423, %v411
        %v426 = vadd.f32 %v424, 1e-05
        %v427 = vadd.f32 %v425, 1e-05
        %v428 = vrsqrt.pop %v426
        %v429 = vrsqrt.pop %v427
        %v430 = vmul.f32 %v414, %v428
        %v431 = vmul.f32 %v415, %v429
        %v433 = vlaneseq
        %v434 = vshrl.u32 %v433, 7
        %v435 = vsub.s32 0, %v434
        %v436 = vrot.slane %v402, %v435
        %v438 = vmul.f32 %v430, %v436
        %v439 = vmul.f32 %v431, %v436
        %v441 = vlaneseq
        %v442 = vshrl.u32 %v441, 7
        %v443 = vsub.s32 0, %v442
        %v444 = vrot.slane %v403, %v443
        %v446 = vadd.f32 %v438, %v444
        %v447 = vadd.f32 %v439, %v444
        %v448 = vpack.c.bf16 %v447, %v446
        %v449 = vld [vmem:[#allocation5] sm:$0xf]
        %v450 = vld [vmem:[#allocation5 + $0x4] sm:$0xf]
        %v451 = vld [vmem:[#allocation5 + $0x8] sm:$0xf]
        %v452 = vld [vmem:[#allocation5 + $0xc] sm:$0xf]
        %v457 = vunpack.c.l.b16 %v449
        %v458 = vunpack.c.l.b16 %v450
        %v459 = vunpack.c.l.b16 %v451
        %v460 = vunpack.c.l.b16 %v452
        %v461 = vpack.c.b16 %v458, %v457
        %v462 = vpack.c.b16 %v460, %v459
        %v466 = vsel %vm404, %v448, 0
        %468 = vmatprep.subr.bf16.mxu0 0
        %469 = vmatpush1.bf16.msra.mxu0 %v461
        %470 = vmatprep.subr.bf16.mxu0 0
        %471 = vmatpush1.bf16.msra.mxu0 %v462
        %472 = vmatprep.subr.bf16.mxu0 0
        %473 = vmatpush1.bf16.msra.mxu0 0
        %474 = vmatprep.subr.bf16.mxu0 0
        %475 = vmatpush1.bf16.msra.mxu0 0
        %476 = vmatprep.subr.bf16.mxu0 0
        %477 = vmatpush1.bf16.msra.mxu0 0
        %478 = vmatprep.subr.bf16.mxu0 0
        %479 = vmatpush1.bf16.msra.mxu0 0
        %480 = vmatprep.subr.bf16.mxu0 0
        %481 = vmatpush1.bf16.msra.mxu0 0
        %482 = vmatprep.subr.bf16.mxu0 0
        %483 = vmatpush1.bf16.msra.mxu0 0
        %484 = vmatprep.subr.bf16.mxu0 0
        %485 = vmatpush1.bf16.msra.mxu0 0
        %486 = vmatprep.subr.bf16.mxu0 0
        %487 = vmatpush1.bf16.msra.mxu0 0
        %488 = vmatprep.subr.bf16.mxu0 0
        %489 = vmatpush1.bf16.msra.mxu0 0
        %490 = vmatprep.subr.bf16.mxu0 0
        %491 = vmatpush1.bf16.msra.mxu0 0
        %492 = vmatprep.subr.bf16.mxu0 0
        %493 = vmatpush1.bf16.msra.mxu0 0
        %494 = vmatprep.subr.bf16.mxu0 0
        %495 = vmatpush1.bf16.msra.mxu0 0
        %496 = vmatprep.subr.bf16.mxu0 0
        %497 = vmatpush1.bf16.msra.mxu0 0
        %498 = vmatprep.subr.bf16.mxu0 0
        %499 = vmatpush1.bf16.msra.mxu0 0
        %500 = vmatprep.mubr.bf16.mxu0 0
        %501 = vmatmul.mubr.bf16.gmra.mrb[0].mxu0 %v466
        %v502 = vpop.f32.mrb[0].mxu0
        %v503 = vadd.f32 0.0, %v502
        %v504 = vpop.f32.mrb[0].mxu0
        %v505 = vpop.f32.mrb[0].mxu0
        %v506 = vadd.f32 0.0, %v505
        %v507 = vpop.f32.mrb[0].mxu0
        %508 = vdwg.mxu0
        %v509 = vmul.f32 %v503, 0.17677669
        %v510 = vmul.f32 %v506, 0.17677669
        %v511 = vpack.c.bf16 %v510, %v509
        %v513 = vunpack.c.l.b16 %v511
        %v514 = vunpack.c.h.b16 %v511
        %v515 = vpack.c.b16 %v513, %v513
        %v516 = vpack.c.b16 %v514, %v514
        %vm519 = vcmask 257024
        %520 = vst.msk [vmem:[%s378] sm:$0xf] %vm519, %v515
        %521 = vst.msk [vmem:[%s378 + $0x4] sm:$0xf] %vm519, %v516
        %v522 = vld [vmem:[#allocation7] sm:$0xf]
        %v523 = vld [vmem:[#allocation7 + $0x4] sm:$0xf]
        %v524 = vld [vmem:[#allocation7 + $0x8] sm:$0xf]
        %v525 = vld [vmem:[#allocation7 + $0xc] sm:$0xf]
        %v530 = vunpack.c.l.b16 %v522
        %v531 = vunpack.c.l.b16 %v523
        %v532 = vunpack.c.l.b16 %v524
        %v533 = vunpack.c.l.b16 %v525
        %v534 = vpack.c.b16 %v531, %v530
        %v535 = vpack.c.b16 %v533, %v532
        %538 = vmatprep.subr.bf16.mxu0 0
        %539 = vmatpush1.bf16.msra.mxu0 %v534
        %540 = vmatprep.subr.bf16.mxu0 0
        %541 = vmatpush1.bf16.msra.mxu0 %v535
        %542 = vmatprep.subr.bf16.mxu0 0
        %543 = vmatpush1.bf16.msra.mxu0 0
        %544 = vmatprep.subr.bf16.mxu0 0
        %545 = vmatpush1.bf16.msra.mxu0 0
        %546 = vmatprep.subr.bf16.mxu0 0
        %547 = vmatpush1.bf16.msra.mxu0 0
        %548 = vmatprep.subr.bf16.mxu0 0
        %549 = vmatpush1.bf16.msra.mxu0 0
        %550 = vmatprep.subr.bf16.mxu0 0
        %551 = vmatpush1.bf16.msra.mxu0 0
        %552 = vmatprep.subr.bf16.mxu0 0
        %553 = vmatpush1.bf16.msra.mxu0 0
        %554 = vmatprep.subr.bf16.mxu0 0
        %555 = vmatpush1.bf16.msra.mxu0 0
        %556 = vmatprep.subr.bf16.mxu0 0
        %557 = vmatpush1.bf16.msra.mxu0 0
        %558 = vmatprep.subr.bf16.mxu0 0
        %559 = vmatpush1.bf16.msra.mxu0 0
        %560 = vmatprep.subr.bf16.mxu0 0
        %561 = vmatpush1.bf16.msra.mxu0 0
        %562 = vmatprep.subr.bf16.mxu0 0
        %563 = vmatpush1.bf16.msra.mxu0 0
        %564 = vmatprep.subr.bf16.mxu0 0
        %565 = vmatpush1.bf16.msra.mxu0 0
        %566 = vmatprep.subr.bf16.mxu0 0
        %567 = vmatpush1.bf16.msra.mxu0 0
        %568 = vmatprep.subr.bf16.mxu0 0
        %569 = vmatpush1.bf16.msra.mxu0 0
        %570 = vmatprep.mubr.bf16.mxu0 0
        %571 = vmatmul.mubr.bf16.gmra.mrb[0].mxu0 %v466
        %v572 = vpop.f32.mrb[0].mxu0
        %v573 = vadd.f32 0.0, %v572
        %v574 = vpop.f32.mrb[0].mxu0
        %v575 = vpop.f32.mrb[0].mxu0
        %v576 = vadd.f32 0.0, %v575
        %v577 = vpop.f32.mrb[0].mxu0
        %578 = vdwg.mxu0
        %v579 = vpack.c.bf16 %v576, %v573
        %v581 = vunpack.c.l.b16 %v579
        %v582 = vunpack.c.h.b16 %v579
        %v583 = vpack.c.b16 %v581, %v581
        %v584 = vpack.c.b16 %v582, %v582
        %587 = vst.msk [vmem:[%s385] sm:$0xf] %vm519, %v583
        %588 = vst.msk [vmem:[%s385 + $0x4] sm:$0xf] %vm519, %v584
        %v589 = vld [vmem:[%s5] sm:$0xf]
        %v590 = vld [vmem:[%s5 + $0x4] sm:$0xf]
        %v591 = vld [vmem:[%s5 + $0x8] sm:$0xf]
        %v592 = vld [vmem:[%s5 + $0xc] sm:$0xf]
        %v597 = vunpack.c.l.b16 %v589
        %v598 = vunpack.c.l.b16 %v590
        %v599 = vunpack.c.l.b16 %v591
        %v600 = vunpack.c.l.b16 %v592
        %v601 = vpack.c.b16 %v598, %v597
        %v602 = vpack.c.b16 %v600, %v599
        %605 = vmatprep.subr.bf16.mxu0 0
        %606 = vmatpush1.bf16.msra.mxu0 %v601
        %607 = vmatprep.subr.bf16.mxu0 0
        %608 = vmatpush1.bf16.msra.mxu0 %v602
        %609 = vmatprep.subr.bf16.mxu0 0
        %610 = vmatpush1.bf16.msra.mxu0 0
        %611 = vmatprep.subr.bf16.mxu0 0
        %612 = vmatpush1.bf16.msra.mxu0 0
        %613 = vmatprep.subr.bf16.mxu0 0
        %614 = vmatpush1.bf16.msra.mxu0 0
        %615 = vmatprep.subr.bf16.mxu0 0
        %616 = vmatpush1.bf16.msra.mxu0 0
        %617 = vmatprep.subr.bf16.mxu0 0
        %618 = vmatpush1.bf16.msra.mxu0 0
        %619 = vmatprep.subr.bf16.mxu0 0
        %620 = vmatpush1.bf16.msra.mxu0 0
        %621 = vmatprep.subr.bf16.mxu0 0
        %622 = vmatpush1.bf16.msra.mxu0 0
        %623 = vmatprep.subr.bf16.mxu0 0
        %624 = vmatpush1.bf16.msra.mxu0 0
        %625 = vmatprep.subr.bf16.mxu0 0
        %626 = vmatpush1.bf16.msra.mxu0 0
        %627 = vmatprep.subr.bf16.mxu0 0
        %628 = vmatpush1.bf16.msra.mxu0 0
        %629 = vmatprep.subr.bf16.mxu0 0
        %630 = vmatpush1.bf16.msra.mxu0 0
        %631 = vmatprep.subr.bf16.mxu0 0
        %632 = vmatpush1.bf16.msra.mxu0 0
        %633 = vmatprep.subr.bf16.mxu0 0
        %634 = vmatpush1.bf16.msra.mxu0 0
        %635 = vmatprep.subr.bf16.mxu0 0
        %636 = vmatpush1.bf16.msra.mxu0 0
        %637 = vmatprep.mubr.bf16.mxu0 0
        %638 = vmatmul.mubr.bf16.gmra.mrb[0].mxu0 %v466
        %v639 = vpop.f32.mrb[0].mxu0
        %v640 = vadd.f32 0.0, %v639
        %v641 = vpop.f32.mrb[0].mxu0
        %v642 = vpop.f32.mrb[0].mxu0
        %v643 = vadd.f32 0.0, %v642
        %v644 = vpop.f32.mrb[0].mxu0
        %645 = vdwg.mxu0
        %v646 = vpack.c.bf16 %v643, %v640
        %v648 = vunpack.c.l.b16 %v646
        %v649 = vunpack.c.h.b16 %v646
        %v650 = vpack.c.b16 %v648, %v648
        %v651 = vpack.c.b16 %v649, %v649
        %654 = vst.msk [vmem:[%s392] sm:$0xf] %vm519, %v650
        %655 = vst.msk [vmem:[%s392 + $0x4] sm:$0xf] %vm519, %v651
        %s656 = sand.u32 %s185, 1
        %s657 = scalar_lea.sflag [#allocation4], %s656
        %s658 = sand.u32 %s185, 1
        %s659 = smul.addr %s658, 8
        %s660 = scalar_lea.vmem [#allocation8], %s659
        %s661 = sand.u32 %s30, 1
        %s662 = scalar_lea.sflag [#allocation10], %s661
        %s663 = sand.u32 %s213, 1
        %s664 = smul.addr %s663, 8
        %s665 = scalar_lea.vmem [#allocation9], %s664
        %s666 = sand.u32 %s30, 1
        %s667 = scalar_lea.sflag [#allocation10], %s666
        %s668 = sand.u32 %s241, 1
        %s669 = smul.addr %s668, 8
        %s670 = scalar_lea.vmem [#allocation11], %s669
        // Predicated region
        $region57: #{tpu_custom_call.1} parent=43 // pred_check
          %p671 = pneg %p195
        $region58: #{tpu_custom_call.1} parent=43 // pred_check_branch
          %673 = sbr.rel (%p671) target = $region60
        $region59: #{tpu_custom_call.1} parent=43 // pred_region
          %s674 = smul.u32 2, %s35
          %s676 = ssub.s32 128, 128
          %677 = vsyncadd %s657, %s676
          %s678 = smul.addr %s34, 4
          %s679 = sadd.s32 %s674, %s678
          %s680 = smul.addr %s679, 64
          %s681 = scalar_lea.hbm %s6, %s680
          %s682 = sshll.u32 %s660, 4
          %s683 = int_to_ptr.vmem [resolvable:$true] %s682
          %688 = dma.vmem_to_hbm [thread:$0]  %s683, 128, %s681, %s657, 64, 64, 4
        $region60: #{tpu_custom_call.1} parent=43 // pred_fallthru
          _
        // Predicated region
        $region61: #{tpu_custom_call.1} parent=43 // pred_check
          %p689 = pneg %p223
        $region62: #{tpu_custom_call.1} parent=43 // pred_check_branch
          %691 = sbr.rel (%p689) target = $region64
        $region63: #{tpu_custom_call.1} parent=43 // pred_region
          %s692 = smul.u32 2, %s35
          %s694 = ssub.s32 128, 128
          %695 = vsyncadd %s662, %s694
          %s696 = smul.addr %s34, 4
          %s697 = sadd.s32 %s692, %s696
          %s698 = smul.addr %s697, 64
          %s699 = scalar_lea.hbm %s7, %s698
          %s700 = sshll.u32 %s665, 4
          %s701 = int_to_ptr.vmem [resolvable:$true] %s700
          %706 = dma.vmem_to_hbm [thread:$0]  %s701, 128, %s699, %s662, 64, 64, 4
        $region64: #{tpu_custom_call.1} parent=43 // pred_fallthru
          _
        // Predicated region
        $region65: #{tpu_custom_call.1} parent=43 // pred_check
          %p707 = pneg %p251
        $region66: #{tpu_custom_call.1} parent=43 // pred_check_branch
          %709 = sbr.rel (%p707) target = $region68
        $region67: #{tpu_custom_call.1} parent=43 // pred_region
          %s710 = smul.u32 2, %s35
          %s712 = ssub.s32 128, 128
          %713 = vsyncadd %s667, %s712
          %s714 = smul.addr %s34, 4
          %s715 = sadd.s32 %s710, %s714
          %s716 = smul.addr %s715, 64
          %s717 = scalar_lea.hbm %s8, %s716
          %s718 = sshll.u32 %s670, 4
          %s719 = int_to_ptr.vmem [resolvable:$true] %s718
          %724 = dma.vmem_to_hbm [thread:$0]  %s719, 128, %s717, %s667, 64, 64, 4
        $region68: #{tpu_custom_call.1} parent=43 // pred_fallthru
          _
      $region44: #{tpu_custom_call.1} parent=5 // pred_fallthru
        _
      %p725 = scmp.le.s32.totalorder 2, %s25
      // Predicated region
      $region69: #{tpu_custom_call.1} parent=5 // pred_check
        %p726 = pneg %p725
      $region70: #{tpu_custom_call.1} parent=5 // pred_check_branch
        %728 = sbr.rel (%p726) target = $region72
      $region71: #{tpu_custom_call.1} parent=5 // pred_region
        %s729 = ssub.s32 %s25, 2
        // Predicated region
        $region73: #{tpu_custom_call.1} parent=71 // pred_check
          %p730 = pneg %p201
        $region74: #{tpu_custom_call.1} parent=71 // pred_check_branch
          %732 = sbr.rel (%p730) target = $region76
        $region75: #{tpu_custom_call.1} parent=71 // pred_region
          %s733 = sand.u32 %s186, 1
          %s734 = scalar_lea.sflag [#allocation4], %s733
          %s735 = sand.u32 %s186, 1
          %s736 = smul.addr %s735, 8
          %s737 = scalar_lea.vmem [#allocation8], %s736
          %738 = dma.done %s734, 128
        $region76: #{tpu_custom_call.1} parent=71 // pred_fallthru
          _
        // Predicated region
        $region77: #{tpu_custom_call.1} parent=71 // pred_check
          %p739 = pneg %p229
        $region78: #{tpu_custom_call.1} parent=71 // pred_check_branch
          %741 = sbr.rel (%p739) target = $region80
        $region79: #{tpu_custom_call.1} parent=71 // pred_region
          %s742 = sand.u32 %s31, 1
          %s743 = scalar_lea.sflag [#allocation10], %s742
          %s744 = sand.u32 %s214, 1
          %s745 = smul.addr %s744, 8
          %s746 = scalar_lea.vmem [#allocation9], %s745
          %747 = dma.done %s743, 128
        $region80: #{tpu_custom_call.1} parent=71 // pred_fallthru
          _
        // Predicated region
        $region81: #{tpu_custom_call.1} parent=71 // pred_check
          %p748 = pneg %p257
        $region82: #{tpu_custom_call.1} parent=71 // pred_check_branch
          %750 = sbr.rel (%p748) target = $region84
        $region83: #{tpu_custom_call.1} parent=71 // pred_region
          %s751 = sand.u32 %s31, 1
          %s752 = scalar_lea.sflag [#allocation10], %s751
          %s753 = sand.u32 %s242, 1
          %s754 = smul.addr %s753, 8
          %s755 = scalar_lea.vmem [#allocation11], %s754
          %756 = dma.done %s752, 128
        $region84: #{tpu_custom_call.1} parent=71 // pred_fallthru
          _
      $region72: #{tpu_custom_call.1} parent=5 // pred_fallthru
        _
    $region6: #{tpu_custom_call.1} parent=1 // loop_footer
      %s29 = sadd.s32 1, %s25
    $region7: #{tpu_custom_call.1} parent=1 // loop_footer_branch
      %24 = sbr.rel target = $region3
    $region8: #{tpu_custom_call.1} parent=1 // loop_exit
      _
    %757 = vsyncpa [#allocation3], 1
    %s758 = scalar_lea.sflag [#allocation3], 1
    %759 = vsyncpa %s758, 1
    %760 = vsyncpa [#allocation6], 1
    %761 = vsyncpa [#allocation4], 1
    %s762 = scalar_lea.sflag [#allocation4], 1
    %763 = vsyncpa %s762, 1
    %764 = vsyncpa [#allocation10], 1
    %s765 = scalar_lea.sflag [#allocation10], 1
    %766 = vsyncpa %s765, 1

</llo_original>
